<compile_context>
chip_gen: v7x
topology: tpu7x:2x2x1
jax: 0.10.0
libtpu: 0.0.40
codegen_flags: <defaults>
</compile_context>

<pallas_src>
import functools

import jax
import jax.numpy as jnp
from jax import lax
from jax.experimental import pallas as pl
from jax.experimental.pallas import tpu as pltpu

NEG_SLOPE = 0.01  # PyTorch nn.LeakyReLU() default


def _leaky_relu(v):
    return jnp.where(v >= 0, v, NEG_SLOPE * v)


# ----------------------------------------------------------------- fused path
def _se_fused_kernel(x_ref, w1_ref, w2t_ref, o_ref, *, inv_hw, use_mxu):
    x = x_ref[...]                                             # (Bt, C, HW)

    # Squeeze: global average pool with f32 accumulation (no persistent f32
    # copy of the block is kept for the scale step).
    y = jnp.sum(x.astype(jnp.float32), axis=-1) * inv_hw       # (Bt, C)

    w1 = w1_ref[...]                                           # (hidden, C)
    w2t = w2t_ref[...]                                         # (hidden, C) == w2.T
    if use_mxu:
        # Large C / hidden: contract on the MXU (separate issue slot).
        h = lax.dot_general(y, w1, (((1,), (1,)), ((), ())),
                            preferred_element_type=jnp.float32)
        h = _leaky_relu(h)                                     # (Bt, hidden)
        s = jnp.dot(h, w2t, preferred_element_type=jnp.float32)
        s = _leaky_relu(s)                                     # (Bt, C)
    else:
        # Tiny FCs: VPU broadcast-multiply + reduce; MXU is useless here.
        h = _leaky_relu(jnp.sum(y[:, None, :] * w1[None, :, :], axis=-1))
        s = _leaky_relu(jnp.sum(h[:, :, None] * w2t[None, :, :], axis=1))

    # Excite: scale in the input dtype (native bf16 on v6e/v7x; exact for f32).
    o_ref[...] = x * s.astype(o_ref.dtype)[:, :, None]


def _pick_bt(batch, per_b_bytes, budget_bytes):
    """Pick a batch-tile size.  Prefers >=4 pipeline stages (blocks >=1 MiB),
    then >=2 stages, then the largest fitting divisor.  Returns None when even
    a single batch element does not fit (caller falls back to streaming)."""
    divisors = [d for d in range(1, batch + 1) if batch % d == 0]
    fitting = [d for d in divisors if d * per_b_bytes <= budget_bytes]
    if not fitting:
        return None
    deep = [d for d in fitting if batch // d >= 4 and d * per_b_bytes >= (1 << 20)]
    if deep:
        return max(deep)
    multi = [d for d in fitting if batch // d >= 2]
    if multi:
        return max(multi)
    return max(fitting)


# ------------------------------------------------------------ streamed fallback
def _gap_kernel(x_ref, acc_ref, *, hw, chunk):
    k = pl.program_id(1)

    @pl.when(k == 0)
    def _():
        acc_ref[...] = jnp.zeros_like(acc_ref)

    x = x_ref[...].astype(jnp.float32)                          # (1, C, chunk)
    idx = lax.broadcasted_iota(jnp.int32, x.shape, 2) + k * chunk
    x = jnp.where(idx < hw, x, 0.0)                             # mask padded tail
    acc_ref[...] += jnp.sum(x, axis=-1, keepdims=True)          # (1, C, 1)


def _scale_kernel(x_ref, s_ref, o_ref):
    # (1, C, chunk) * (1, C, 1), computed in the input dtype.
    o_ref[...] = x_ref[...] * s_ref[...].astype(o_ref.dtype)


def _se_layer_streamed(x_flat, w1_f, w2t_f, budget_bytes):
    B, C, HW = x_flat.shape
    itemsize = jnp.dtype(x_flat.dtype).itemsize
    # Lane-aligned spatial chunk that fits the budget (>= 128 lanes).
    chunk = max(128, (budget_bytes // max(1, C * itemsize)) // 128 * 128)
    if chunk >= HW:
        chunk = HW
    n_chunks = pl.cdiv(HW, chunk)
    chunk_bytes = C * chunk * itemsize
    vmem_limit = int(min(48 << 20, max(16 << 20, 6 * chunk_bytes + (2 << 20))))
    # TODO(synk): also tile C here when C alone is too large for a VMEM chunk.

    gap = pl.pallas_call(
        functools.partial(_gap_kernel, hw=HW, chunk=chunk),
        out_shape=jax.ShapeDtypeStruct((B, C, 1), jnp.float32),
        grid=(B, n_chunks),
        in_specs=[pl.BlockSpec((1, C, chunk), lambda b, k: (b, 0, k))],
        out_specs=pl.BlockSpec((1, C, 1), lambda b, k: (b, 0, 0)),
        compiler_params=pltpu.CompilerParams(
            dimension_semantics=("parallel", "arbitrary"),
            vmem_limit_bytes=vmem_limit),
    )(x_flat)

    # Tiny excitation on (B, C): plain JAX (negligible vs. streaming x twice).
    y = gap[:, :, 0] * (1.0 / HW)                               # (B, C) f32
    h = _leaky_relu(y @ jnp.transpose(w1_f))                    # (B, hidden)
    s = _leaky_relu(h @ w2t_f)                                  # (B, C)
    s = s.reshape(B, C, 1)

    out = pl.pallas_call(
        _scale_kernel,
        out_shape=jax.ShapeDtypeStruct((B, C, HW), x_flat.dtype),
        grid=(B, n_chunks),
        in_specs=[pl.BlockSpec((1, C, chunk), lambda b, k: (b, 0, k)),
                  pl.BlockSpec((1, C, 1), lambda b, k: (b, 0, 0))],
        out_specs=pl.BlockSpec((1, C, chunk), lambda b, k: (b, 0, k)),
        compiler_params=pltpu.CompilerParams(
            dimension_semantics=("parallel", "parallel"),
            vmem_limit_bytes=vmem_limit),
    )(x_flat, s)
    return out


# --------------------------------------------------------------------- wrapper
def se_layer(x, w1, w2, *, block_budget_bytes=4 << 20, donate_x=False):
    """x: (B, C, H, W); w1: (C//r, C); w2: (C, C//r)  (nn.Linear, bias=False)."""
    B, C, H, W = x.shape
    hidden = w1.shape[0]
    HW = H * W

    x_flat = x.reshape(B, C, HW)                  # no padding, no post-slice

    # Weights in f32, contraction-friendly layout; resident (constant index_map).
    w1_f = w1.astype(jnp.float32)                 # (hidden, C)
    w2t_f = jnp.transpose(w2).astype(jnp.float32)  # (hidden, C)

    itemsize = jnp.dtype(x.dtype).itemsize
    per_b_bytes = C * HW * itemsize
    bt = _pick_bt(B, per_b_bytes, block_budget_bytes)

    if bt is None:
        # A single batch element exceeds the VMEM block budget: stream it.
        out_flat = _se_layer_streamed(x_flat, w1_f, w2t_f, block_budget_bytes)
        return out_flat.reshape(B, C, H, W)

    block_bytes = bt * per_b_bytes
    w_bytes = (w1_f.size + w2t_f.size) * 4
    # Double-buffered input + output blocks + resident f32 weights + scratch
    # slack; capped well below v7x's 64 MiB physical VMEM.
    vmem_limit = int(min(48 << 20,
                         max(16 << 20, 5 * block_bytes + 4 * w_bytes + (2 << 20))))

    use_mxu = (C >= 256) and (hidden >= 8)
    kernel = functools.partial(_se_fused_kernel, inv_hw=1.0 / HW, use_mxu=use_mxu)

    out_flat = pl.pallas_call(
        kernel,
        out_shape=jax.ShapeDtypeStruct((B, C, HW), x.dtype),
        grid=(B // bt,),
        in_specs=[
            pl.BlockSpec((bt, C, HW), lambda b: (b, 0, 0)),
            pl.BlockSpec((hidden, C), lambda b: (0, 0)),
            pl.BlockSpec((hidden, C), lambda b: (0, 0)),
        ],
        out_specs=pl.BlockSpec((bt, C, HW), lambda b: (b, 0, 0)),
        compiler_params=pltpu.CompilerParams(
            dimension_semantics=("parallel",),
            vmem_limit_bytes=vmem_limit),
        # Alias x's buffer onto the output when the caller donates x (saves the
        # second B*C*HW HBM allocation; caller must not reuse x afterwards).
        input_output_aliases=({0: 0} if donate_x else {}),
    )(x_flat, w1_f, w2t_f)

    return out_flat.reshape(B, C, H, W)


def se_layer_ref(x, w1, w2):
    """Pure-JAX reference matching the PyTorch forward."""
    y = jnp.mean(x.astype(jnp.float32), axis=(2, 3))            # (B, C)
    y = _leaky_relu(y @ w1.T.astype(jnp.float32))               # (B, C//r)
    y = _leaky_relu(y @ w2.T.astype(jnp.float32))               # (B, C)
    return (x.astype(jnp.float32) * y[:, :, None, None]).astype(x.dtype)


if __name__ == "__main__":
    # Shapes consistent with the module: channel=32, reduction=16 -> hidden=2.
    C, reduction = 32, 16
    hidden = C // reduction

    key = jax.random.PRNGKey(0)
    kx, k1, k2, kx2 = jax.random.split(key, 4)

    bound1 = 1.0 / (C ** 0.5)
    bound2 = 1.0 / (hidden ** 0.5)
    w1 = jax.random.uniform(k1, (hidden, C), jnp.float32, -bound1, bound1)
    w2 = jax.random.uniform(k2, (C, hidden), jnp.float32, -bound2, bound2)

    # Case 1: fused path, 128-aligned spatial dim.
    x = jax.random.normal(kx, (2, C, 16, 16), dtype=jnp.float32)
    out = jax.block_until_ready(se_layer(x, w1, w2))
    ref = se_layer_ref(x, w1, w2)
    assert out.shape == x.shape
    assert jnp.allclose(out, ref, atol=1e-5, rtol=1e-5), "fused (aligned) mismatch"

    # Case 2: fused path, unaligned spatial dim (H*W = 100): no pad / no slice,
    # full-extent last-dim block with a masked tail store.
    x2 = jax.random.normal(kx2, (2, C, 10, 10), dtype=jnp.float32)
    out2 = jax.block_until_ready(se_layer(x2, w1, w2))
    ref2 = se_layer_ref(x2, w1, w2)
    assert jnp.allclose(out2, ref2, atol=1e-5, rtol=1e-5), "fused (unaligned) mismatch"

    # Case 3: force the streamed fallback (budget smaller than one batch element).
    out3 = jax.block_until_ready(se_layer(x, w1, w2, block_budget_bytes=16 << 10))
    assert jnp.allclose(out3, ref, atol=1e-5, rtol=1e-5), "streamed fallback mismatch"

    print("KERNEL_OK")
</pallas_src>

<mosaic_0001>
module attributes {stable_mosaic.version = 11 : i64} {
  func.func @_se_fused_kernel(%arg0: i32, %arg1: memref<1x32x256xf32, #tpu.memory_space<vmem>>, %arg2: memref<2x32xf32, #tpu.memory_space<vmem>>, %arg3: memref<2x32xf32, #tpu.memory_space<vmem>>, %arg4: memref<1x32x256xf32, #tpu.memory_space<vmem>>) attributes {dimension_semantics = [#tpu.dimension_semantics<parallel>], iteration_bounds = array<i64: 2>, scalar_prefetch = 0 : i64, scratch_operands = 0 : i64, tpu.core_type = #tpu.core_type<tc>, window_params = [{transform_indices = @transform_0, window_bounds = array<i64: 1, 32, 256>}, {pipeline_mode = #tpu.pipeline_mode<synchronous>, transform_indices = @transform_1, window_bounds = array<i64: 2, 32>}, {pipeline_mode = #tpu.pipeline_mode<synchronous>, transform_indices = @transform_2, window_bounds = array<i64: 2, 32>}, {transform_indices = @transform_3, window_bounds = array<i64: 1, 32, 256>}]} {
    %c0 = arith.constant 0 : index
    %c0_0 = arith.constant 0 : index
    %c0_1 = arith.constant 0 : index
    %0 = vector.load %arg1[%c0, %c0_0, %c0_1] : memref<1x32x256xf32, #tpu.memory_space<vmem>>, vector<1x32x256xf32>
    %cst = arith.constant dense<0.000000e+00> : vector<1x32xf32>
    %1 = vector.multi_reduction <add>, %0, %cst [2] : vector<1x32x256xf32> to vector<1x32xf32>
    %cst_2 = arith.constant 3.906250e-03 : f32
    %2 = vector.broadcast %cst_2 : f32 to vector<1x32xf32>
    %3 = arith.mulf %1, %2 : vector<1x32xf32>
    %c0_3 = arith.constant 0 : index
    %c0_4 = arith.constant 0 : index
    %4 = vector.load %arg2[%c0_3, %c0_4] : memref<2x32xf32, #tpu.memory_space<vmem>>, vector<2x32xf32>
    %c0_5 = arith.constant 0 : index
    %c0_6 = arith.constant 0 : index
    %5 = vector.load %arg3[%c0_5, %c0_6] : memref<2x32xf32, #tpu.memory_space<vmem>>, vector<2x32xf32>
    %6 = vector.shape_cast %3 : vector<1x32xf32> to vector<1x1x32xf32>
    %7 = vector.shape_cast %4 : vector<2x32xf32> to vector<1x2x32xf32>
    %8 = vector.broadcast %6 : vector<1x1x32xf32> to vector<1x2x32xf32>
    %9 = arith.mulf %8, %7 : vector<1x2x32xf32>
    %cst_7 = arith.constant dense<0.000000e+00> : vector<1x2xf32>
    %10 = vector.multi_reduction <add>, %9, %cst_7 [2] : vector<1x2x32xf32> to vector<1x2xf32>
    %cst_8 = arith.constant 0.000000e+00 : f32
    %11 = vector.broadcast %cst_8 : f32 to vector<1x2xf32>
    %12 = arith.cmpf oge, %10, %11 : vector<1x2xf32>
    %cst_9 = arith.constant 0.00999999977 : f32
    %13 = vector.broadcast %cst_9 : f32 to vector<1x2xf32>
    %14 = arith.mulf %13, %10 : vector<1x2xf32>
    %15 = arith.select %12, %10, %14 : vector<1x2xi1>, vector<1x2xf32>
    %16 = vector.shape_cast %15 : vector<1x2xf32> to vector<1x2x1xf32>
    %17 = vector.shape_cast %5 : vector<2x32xf32> to vector<1x2x32xf32>
    %18 = vector.broadcast %16 : vector<1x2x1xf32> to vector<1x2x32xf32>
    %19 = arith.mulf %18, %17 : vector<1x2x32xf32>
    %cst_10 = arith.constant dense<0.000000e+00> : vector<1x32xf32>
    %20 = vector.multi_reduction <add>, %19, %cst_10 [1] : vector<1x2x32xf32> to vector<1x32xf32>
    %cst_11 = arith.constant 0.000000e+00 : f32
    %21 = vector.broadcast %cst_11 : f32 to vector<1x32xf32>
    %22 = arith.cmpf oge, %20, %21 : vector<1x32xf32>
    %cst_12 = arith.constant 0.00999999977 : f32
    %23 = vector.broadcast %cst_12 : f32 to vector<1x32xf32>
    %24 = arith.mulf %23, %20 : vector<1x32xf32>
    %25 = arith.select %22, %20, %24 : vector<1x32xi1>, vector<1x32xf32>
    %26 = vector.shape_cast %25 : vector<1x32xf32> to vector<1x32x1xf32>
    %27 = vector.broadcast %26 : vector<1x32x1xf32> to vector<1x32x256xf32>
    %28 = arith.mulf %0, %27 : vector<1x32x256xf32>
    %c0_13 = arith.constant 0 : index
    %c0_14 = arith.constant 0 : index
    %c0_15 = arith.constant 0 : index
    %29 = vector.load %arg4[%c0_13, %c0_14, %c0_15] : memref<1x32x256xf32, #tpu.memory_space<vmem>>, vector<1x32x256xf32>
    tpu.vector_store %arg4[%c0_13, %c0_14, %c0_15], %28 {strides = array<i32>} : memref<1x32x256xf32, #tpu.memory_space<vmem>>, vector<1x32x256xf32>,
    return
  }
  func.func @transform_0(%arg0: i32) -> (i32, i32, i32) {
    %c0_i32 = arith.constant 0 : i32
    %c0_i32_0 = arith.constant 0 : i32
    %c0_i32_1 = arith.constant 0 : i32
    return %arg0, %c0_i32, %c0_i32_0 : i32, i32, i32
  }
  func.func @transform_1(%arg0: i32) -> (i32, i32) {
    %c0_i32 = arith.constant 0 : i32
    %c0_i32_0 = arith.constant 0 : i32
    %c0_i32_1 = arith.constant 0 : i32
    return %c0_i32, %c0_i32_0 : i32, i32
  }
  func.func @transform_2(%arg0: i32) -> (i32, i32) {
    %c0_i32 = arith.constant 0 : i32
    %c0_i32_0 = arith.constant 0 : i32
    %c0_i32_1 = arith.constant 0 : i32
    return %c0_i32, %c0_i32_0 : i32, i32
  }
  func.func @transform_3(%arg0: i32) -> (i32, i32, i32) {
    %c0_i32 = arith.constant 0 : i32
    %c0_i32_0 = arith.constant 0 : i32
    %c0_i32_1 = arith.constant 0 : i32
    return %arg0, %c0_i32, %c0_i32_0 : i32, i32, i32
  }
}

</mosaic_0001>

<llo_original>
// kernel: tpu_custom_call.1
$region0: #{tpu_custom_call.1}
  #allocation0 [shape = 'u32[]', space=smem, size = 0x4, offset = 0x4, fixed_abs, tag = 'smem constant byte address 0x4 - core index']
  #allocation1 [shape = 'u32[144,128]{1,0:T(1,128)}', space=vmem, size = 0x12000, scoped, tag = 'internal scratch']
  %s0 = inlined_call_operand.hbm [shape: f32[2,32,256], index: 0, kind: input, shape index: {}]
  %s1 = inlined_call_operand.vmem [shape: f32[2,32], index: 1, kind: input, shape index: {}]
  %s2 = inlined_call_operand.vmem [shape: f32[2,32], index: 2, kind: input, shape index: {}]
  %s3 = inlined_call_operand.hbm [shape: f32[2,32,256], index: 3, kind: output, shape index: {}]
  %s4 = sld [smem:[#allocation0]]
  $region49: #{tpu_custom_call.1} parent=0
    _
  %s6 = ssub.s32 1, %s4
  %s7 = scalar_select 0, %s6, %s4
  $region1: #{tpu_custom_call.1} parent=0
    #allocation2 [shape = 'u8[65536]{0}', space=vmem, size = 0x10000, scoped, tag = 'input window, operand 0']
    #allocation3 [shape = 's32[2]{0}', space=sflag, size = 0x8, scoped, tag = 'scoped memory for tpu_custom_call.1']
    #allocation4 [shape = 's32[2]{0}', space=sflag, size = 0x8, scoped, tag = 'scoped memory for tpu_custom_call.1']
    #allocation5 [shape = 'u8[65536]{0}', space=vmem, size = 0x10000, scoped, tag = 'output window, operand 0']
    %8 = vsyncpa [#allocation3], 0
    %s9 = scalar_lea.sflag [#allocation3], 1
    %10 = vsyncpa %s9, 0
    %11 = vsyncpa [#allocation4], 0
    %s12 = scalar_lea.sflag [#allocation4], 1
    %13 = vsyncpa %s12, 0
    loop: start=0, step=1, limit=4
    $region2: #{tpu_custom_call.1} parent=1 // loop_pre_header
      _
    $region3: #{tpu_custom_call.1} parent=1 // loop_header
      %s15 = sphi 0, %s19
      %p16 = scmp.ge.s32.totalorder %s15, 4
      %s25 = sphi 0, %s27
      %s28 = sphi 0, %s25
      %s29 = sphi 0, %s28
      %s45 = sphi 0, %s29
      %s49 = sphi 0, %s49
      %s51 = sphi 0, %s49
      %s52 = sphi 0, %s51
      %s66 = sphi 0, %s52
      %s70 = sphi 0, %s70
      %s72 = sphi 0, %s70
      %s73 = sphi 0, %s72
      %s87 = sphi 0, %s73
      %s93 = sphi 0, %s95
      %s96 = sphi 0, %s93
      %s97 = sphi 0, %s96
      %s113 = sphi 0, %s97
    $region4: #{tpu_custom_call.1} parent=1 // loop_header_branch
      %18 = sbr.rel (%p16) target = $region8
    $region5: #{tpu_custom_call.1} parent=1 // loop_body
      %s20 = ssub.s32 %s15, 1
      %s21 = ssub.s32 %s15, 2
      %s22 = sadd.s32 %s15, 1
      %s23 = ssub.s32 %s15, %s22
      %p24 = scmp.eq.s32.totalorder %s23, 0
      %s26 = sadd.s32 %s25, 1
      %s27 = scalar_select %p24, %s25, %s26
      %p30 = pneg %p24
      %p31 = scmp.eq.s32.totalorder %s15, 1
      %p32 = por %p30, %p31
      %p33 = scmp.ne.s32.totalorder %s25, %s28
      %p34 = scmp.eq.s32.totalorder %s15, 0
      %p35 = por %p33, %p34
      %p36 = scmp.ne.s32.totalorder %s25, %s28
      %p37 = scmp.eq.s32.totalorder %s20, 1
      %p38 = por %p36, %p37
      %p39 = scmp.ne.s32.totalorder %s28, %s29
      %p40 = scmp.eq.s32.totalorder %s20, 0
      %p41 = por %p39, %p40
      %p42 = scmp.ne.s32.totalorder %s28, %s29
      %p43 = scmp.eq.s32.totalorder %s21, 1
      %p44 = por %p42, %p43
      %p46 = scmp.ne.s32.totalorder %s29, %s45
      %p47 = scmp.eq.s32.totalorder %s21, 0
      %p48 = por %p46, %p47
      %s50 = sadd.s32 %s49, 1
      %p53 = scmp.eq.s32.totalorder %s15, 1
      %p54 = scmp.ne.s32.totalorder %s49, %s51
      %p55 = scmp.eq.s32.totalorder %s15, 0
      %p56 = por %p54, %p55
      %p57 = scmp.ne.s32.totalorder %s49, %s51
      %p58 = scmp.eq.s32.totalorder %s20, 1
      %p59 = por %p57, %p58
      %p60 = scmp.ne.s32.totalorder %s51, %s52
      %p61 = scmp.eq.s32.totalorder %s20, 0
      %p62 = por %p60, %p61
      %p63 = scmp.ne.s32.totalorder %s51, %s52
      %p64 = scmp.eq.s32.totalorder %s21, 1
      %p65 = por %p63, %p64
      %p67 = scmp.ne.s32.totalorder %s52, %s66
      %p68 = scmp.eq.s32.totalorder %s21, 0
      %p69 = por %p67, %p68
      %s71 = sadd.s32 %s70, 1
      %p74 = scmp.eq.s32.totalorder %s15, 1
      %p75 = scmp.ne.s32.totalorder %s70, %s72
      %p76 = scmp.eq.s32.totalorder %s15, 0
      %p77 = por %p75, %p76
      %p78 = scmp.ne.s32.totalorder %s70, %s72
      %p79 = scmp.eq.s32.totalorder %s20, 1
      %p80 = por %p78, %p79
      %p81 = scmp.ne.s32.totalorder %s72, %s73
      %p82 = scmp.eq.s32.totalorder %s20, 0
      %p83 = por %p81, %p82
      %p84 = scmp.ne.s32.totalorder %s72, %s73
      %p85 = scmp.eq.s32.totalorder %s21, 1
      %p86 = por %p84, %p85
      %p88 = scmp.ne.s32.totalorder %s73, %s87
      %p89 = scmp.eq.s32.totalorder %s21, 0
      %p90 = por %p88, %p89
      %s91 = ssub.s32 %s15, %s22
      %p92 = scmp.eq.s32.totalorder %s91, 0
      %s94 = sadd.s32 %s93, 1
      %s95 = scalar_select %p92, %s93, %s94
      %p98 = pneg %p92
      %p99 = scmp.eq.s32.totalorder %s15, 1
      %p100 = por %p98, %p99
      %p101 = scmp.ne.s32.totalorder %s93, %s96
      %p102 = scmp.eq.s32.totalorder %s15, 0
      %p103 = por %p101, %p102
      %p104 = scmp.ne.s32.totalorder %s93, %s96
      %p105 = scmp.eq.s32.totalorder %s20, 1
      %p106 = por %p104, %p105
      %p107 = scmp.ne.s32.totalorder %s96, %s97
      %p108 = scmp.eq.s32.totalorder %s20, 0
      %p109 = por %p107, %p108
      %p110 = scmp.ne.s32.totalorder %s96, %s97
      %p111 = scmp.eq.s32.totalorder %s21, 1
      %p112 = por %p110, %p111
      %p114 = scmp.ne.s32.totalorder %s97, %s113
      %p115 = scmp.eq.s32.totalorder %s21, 0
      %p116 = por %p114, %p115
      %p117 = scmp.le.s32.totalorder 1, %s15
      %p118 = scmp.lt.s32.totalorder %s15, 3
      %p119 = pnand %p117, %p118
      %p120 = pneg %p119
      // Predicated region
      $region9: #{tpu_custom_call.1} parent=5 // pred_check
        _
      $region10: #{tpu_custom_call.1} parent=5 // pred_check_branch
        %122 = sbr.rel (%p119) target = $region12
      $region11: #{tpu_custom_call.1} parent=5 // pred_region
        %s123 = ssub.s32 %s15, 1
        // Predicated region
        $region13: #{tpu_custom_call.1} parent=11 // pred_check
          %p124 = pneg %p62
        $region14: #{tpu_custom_call.1} parent=11 // pred_check_branch
          %126 = sbr.rel (%p124) target = $region16
        $region15: #{tpu_custom_call.1} parent=11 // pred_region
          _
        $region16: #{tpu_custom_call.1} parent=11 // pred_fallthru
          _
        // Predicated region
        $region17: #{tpu_custom_call.1} parent=11 // pred_check
          %p127 = pneg %p83
        $region18: #{tpu_custom_call.1} parent=11 // pred_check_branch
          %129 = sbr.rel (%p127) target = $region20
        $region19: #{tpu_custom_call.1} parent=11 // pred_region
          _
        $region20: #{tpu_custom_call.1} parent=11 // pred_fallthru
          _
      $region12: #{tpu_custom_call.1} parent=5 // pred_fallthru
        _
      %p130 = scmp.lt.s32.totalorder %s15, 2
      // Predicated region
      $region21: #{tpu_custom_call.1} parent=5 // pred_check
        %p131 = pneg %p130
      $region22: #{tpu_custom_call.1} parent=5 // pred_check_branch
        %133 = sbr.rel (%p131) target = $region24
      $region23: #{tpu_custom_call.1} parent=5 // pred_region
        // Predicated region
        $region25: #{tpu_custom_call.1} parent=23 // pred_check
          %p134 = pneg %p35
        $region26: #{tpu_custom_call.1} parent=23 // pred_check_branch
          %136 = sbr.rel (%p134) target = $region28
        $region27: #{tpu_custom_call.1} parent=23 // pred_region
          %s137 = sand.u32 %s25, 1
          %s138 = scalar_lea.sflag [#allocation3], %s137
          %s139 = sand.u32 %s25, 1
          %s140 = smul.addr %s139, 64
          %s141 = scalar_lea.vmem [#allocation2], %s140
          %s143 = ssub.s32 1024, 1024
          %144 = vsyncadd %s138, %s143
          %s145 = smul.addr %s15, 8
          %s146 = smul.addr %s145, 128
          %s147 = scalar_lea.hbm %s0, %s146
          %s148 = sshll.u32 %s141, 4
          %s149 = int_to_ptr.vmem [resolvable:$true] %s148
          %154 = dma.hbm_to_vmem [thread:$0]  %s147, 1024, %s149, %s138, 256, 256, 16
        $region28: #{tpu_custom_call.1} parent=23 // pred_fallthru
          _
      $region24: #{tpu_custom_call.1} parent=5 // pred_fallthru
        _
      %p155 = scmp.le.s32.totalorder 1, %s15
      %p156 = scmp.lt.s32.totalorder %s15, 3
      %p157 = pnand %p155, %p156
      %p158 = pneg %p157
      // Predicated region
      $region29: #{tpu_custom_call.1} parent=5 // pred_check
        _
      $region30: #{tpu_custom_call.1} parent=5 // pred_check_branch
        %160 = sbr.rel (%p157) target = $region32
      $region31: #{tpu_custom_call.1} parent=5 // pred_region
        %s161 = ssub.s32 %s15, 1
        %s162 = sand.u32 %s28, 1
        %s163 = scalar_lea.sflag [#allocation3], %s162
        %s164 = sand.u32 %s28, 1
        %s165 = smul.addr %s164, 64
        %s166 = scalar_lea.vmem [#allocation2], %s165
        // Predicated region
        $region33: #{tpu_custom_call.1} parent=31 // pred_check
          %p167 = pneg %p41
        $region34: #{tpu_custom_call.1} parent=31 // pred_check_branch
          %169 = sbr.rel (%p167) target = $region36
        $region35: #{tpu_custom_call.1} parent=31 // pred_region
          %170 = dma.done %s163, 1024
        $region36: #{tpu_custom_call.1} parent=31 // pred_fallthru
          _
        %s171 = sand.u32 %s28, 1
        %s172 = scalar_lea.sflag [#allocation3], %s171
        %s173 = sand.u32 %s28, 1
        %s174 = smul.addr %s173, 64
        %s175 = scalar_lea.vmem [#allocation2], %s174
        %p176 = pneg %p41
        %p177 = pneg %p38
        %p178 = pneg %p62
        %p179 = pneg %p59
        %p180 = pneg %p83
        %p181 = pneg %p80
        %p182 = pneg %p109
        %p183 = pneg %p106
        %s184 = sand.u32 %s96, 1
        %s185 = scalar_lea.sflag [#allocation4], %s184
        %s186 = sand.u32 %s96, 1
        %s187 = smul.addr %s186, 64
        %s188 = scalar_lea.vmem [#allocation5], %s187
        %v189 = vld [vmem:[%s166] sm:$0xff]
        %v190 = vld [vmem:[%s166 + $0x8] sm:$0xff]
        %v191 = vld [vmem:[%s166 + $0x10] sm:$0xff]
        %v192 = vld [vmem:[%s166 + $0x18] sm:$0xff]
        %v193 = vld [vmem:[%s166 + $0x20] sm:$0xff]
        %v194 = vld [vmem:[%s166 + $0x28] sm:$0xff]
        %v195 = vld [vmem:[%s166 + $0x30] sm:$0xff]
        %v196 = vld [vmem:[%s166 + $0x38] sm:$0xff]
        %v197 = vadd.f32 %v189, %v190
        %198 = vadd.xlane.f32.xlu0 %v197
        %v199 = vpop.xlane.xlu0 %198
        %v200 = vadd.f32 %v191, %v192
        %201 = vadd.xlane.f32.xlu0 %v200
        %v202 = vpop.xlane.xlu0 %201
        %v203 = vadd.f32 %v193, %v194
        %204 = vadd.xlane.f32.xlu0 %v203
        %v205 = vpop.xlane.xlu0 %204
        %v206 = vadd.f32 %v195, %v196
        %207 = vadd.xlane.f32.xlu0 %v206
        %v208 = vpop.xlane.xlu0 %207
        %v209 = vmul.f32 %v199, 0.00390625
        %v210 = vmul.f32 %v202, 0.00390625
        %v211 = vmul.f32 %v205, 0.00390625
        %v212 = vmul.f32 %v208, 0.00390625
        %v213 = vld [vmem:[%s1] sm:$0x3]
        %v214 = vld [vmem:[%s2] sm:$0x3]
        %v216 = vlaneseq
        %v217 = vshrl.u32 %v216, 7
        %v218 = vsub.s32 0, %v217
        %v219 = vrot.slane %v213, %v218
        %221 = vbcast.lane.b32.xlu0 %v219, 256
        %v222 = vpop.permute.xlu0 %221
        %s224 = sor.u32 256, 8
        %225 = vbcast.lane.b32.xlu0 %v219, %s224
        %v226 = vpop.permute.xlu0 %225
        %s228 = sor.u32 256, 16
        %229 = vbcast.lane.b32.xlu0 %v219, %s228
        %v230 = vpop.permute.xlu0 %229
        %s232 = sor.u32 256, 24
        %233 = vbcast.lane.b32.xlu0 %v219, %s232
        %v234 = vpop.permute.xlu0 %233
        %v235 = vlaneseq
        %v236 = vshrl.u32 %v235, 7
        %v237 = vsub.s32 1, %v236
        %v238 = vrot.slane %v213, %v237
        %240 = vbcast.lane.b32.xlu0 %v238, 256
        %v241 = vpop.permute.xlu0 %240
        %s243 = sor.u32 256, 8
        %244 = vbcast.lane.b32.xlu0 %v238, %s243
        %v245 = vpop.permute.xlu0 %244
        %s247 = sor.u32 256, 16
        %248 = vbcast.lane.b32.xlu0 %v238, %s247
        %v249 = vpop.permute.xlu0 %248
        %s251 = sor.u32 256, 24
        %252 = vbcast.lane.b32.xlu0 %v238, %s251
        %v253 = vpop.permute.xlu0 %252
        %v262 = vmul.f32 %v209, %v222
        %v263 = vmul.f32 %v210, %v226
        %v264 = vmul.f32 %v211, %v230
        %v265 = vmul.f32 %v212, %v234
        %v266 = vmul.f32 %v209, %v241
        %v267 = vmul.f32 %v210, %v245
        %v268 = vmul.f32 %v211, %v249
        %v269 = vmul.f32 %v212, %v253
        %278 = vset.pattern.permute.xlu0 0
        %279 = vperm.xlu0 %278, %v262
        %v280 = vpop.permute.xlu0 %279
        %281 = vset.pattern.permute.xlu0 0
        %282 = vperm.xlu0 %281, %v263
        %v283 = vpop.permute.xlu0 %282
        %284 = vset.pattern.permute.xlu0 0
        %285 = vperm.xlu0 %284, %v264
        %v286 = vpop.permute.xlu0 %285
        %287 = vset.pattern.permute.xlu0 0
        %288 = vperm.xlu0 %287, %v265
        %v289 = vpop.permute.xlu0 %288
        %290 = vset.pattern.permute.xlu0 0
        %291 = vperm.xlu0 %290, %v266
        %v292 = vpop.permute.xlu0 %291
        %293 = vset.pattern.permute.xlu0 0
        %294 = vperm.xlu0 %293, %v267
        %v295 = vpop.permute.xlu0 %294
        %296 = vset.pattern.permute.xlu0 0
        %297 = vperm.xlu0 %296, %v268
        %v298 = vpop.permute.xlu0 %297
        %299 = vset.pattern.permute.xlu0 0
        %300 = vperm.xlu0 %299, %v269
        %v301 = vpop.permute.xlu0 %300
        %v302 = vlaneseq
        %v303 = vand.u32 %v302, 127
        %v304 = vlaneseq
        %v305 = vshrl.u32 %v304, 7
        %v306 = vsub.s32 %v303, %v305
        %v307 = vrot.slane %v280, %v306
        %v308 = vadd.s32 %v303, 4294967288
        %v309 = vlaneseq
        %v310 = vshrl.u32 %v309, 7
        %v311 = vsub.s32 %v308, %v310
        %v312 = vrot.slane %v283, %v311
        %vm313 = vcmask 130112
        %v314 = vsel %vm313, %v312, %v307
        %v315 = vadd.s32 %v303, 4294967280
        %v316 = vlaneseq
        %v317 = vshrl.u32 %v316, 7
        %v318 = vsub.s32 %v315, %v317
        %v319 = vrot.slane %v286, %v318
        %vm320 = vcmask 195712
        %v321 = vsel %vm320, %v319, %v314
        %v322 = vadd.s32 %v303, 4294967272
        %v323 = vlaneseq
        %v324 = vshrl.u32 %v323, 7
        %v325 = vsub.s32 %v322, %v324
        %v326 = vrot.slane %v289, %v325
        %vm327 = vcmask 261312
        %v328 = vsel %vm327, %v326, %v321
        %v329 = vlaneseq
        %v330 = vshrl.u32 %v329, 7
        %v331 = vsub.s32 %v303, %v330
        %v332 = vrot.slane %v292, %v331
        %v333 = vlaneseq
        %v334 = vshrl.u32 %v333, 7
        %v335 = vsub.s32 %v308, %v334
        %v336 = vrot.slane %v295, %v335
        %v337 = vsel %vm313, %v336, %v332
        %v338 = vlaneseq
        %v339 = vshrl.u32 %v338, 7
        %v340 = vsub.s32 %v315, %v339
        %v341 = vrot.slane %v298, %v340
        %v342 = vsel %vm320, %v341, %v337
        %v343 = vlaneseq
        %v344 = vshrl.u32 %v343, 7
        %v345 = vsub.s32 %v322, %v344
        %v346 = vrot.slane %v301, %v345
        %v347 = vsel %vm327, %v346, %v342
        %vm348 = vcmask 1041409
        %v349 = vsel %vm348, %v347, %v328
        %vm351 = vcmask 254976
        %v352 = vsel %vm351, %v349, 0.0
        %353 = vadd.xlane.f32.xlu0 %v352
        %v354 = vpop.xlane.xlu0 %353
        %vm355 = vcmp.ge.f32.partialorder %v354, 0.0
        %v356 = vmul.f32 %v354, 0.01
        %v357 = vsel %vm355, %v354, %v356
        %v358 = vmul.f32 %v357, %v214
        %v359 = vsel %vm351, %v358, 0.0
        %v360 = vrot.slane %v359, 4
        %v361 = vadd.f32 %v359, %v360
        %v362 = vrot.slane %v361, 2
        %v363 = vadd.f32 %v361, %v362
        %v364 = vrot.slane %v363, 1
        %v365 = vadd.f32 %v363, %v364
        %vm366 = vcmp.ge.f32.partialorder %v365, 0.0
        %v367 = vmul.f32 %v365, 0.01
        %v368 = vsel %vm366, %v365, %v367
        %370 = vbcast.lane.b32.xlu0 %v368, 256
        %v371 = vpop.permute.xlu0 %370
        %s373 = sor.u32 256, 8
        %374 = vbcast.lane.b32.xlu0 %v368, %s373
        %v375 = vpop.permute.xlu0 %374
        %s377 = sor.u32 256, 16
        %378 = vbcast.lane.b32.xlu0 %v368, %s377
        %v379 = vpop.permute.xlu0 %378
        %s381 = sor.u32 256, 24
        %382 = vbcast.lane.b32.xlu0 %v368, %s381
        %v383 = vpop.permute.xlu0 %382
        %v384 = vmul.f32 %v189, %v371
        %v385 = vmul.f32 %v190, %v371
        %v386 = vmul.f32 %v191, %v375
        %v387 = vmul.f32 %v192, %v375
        %v388 = vmul.f32 %v193, %v379
        %v389 = vmul.f32 %v194, %v379
        %v390 = vmul.f32 %v195, %v383
        %v391 = vmul.f32 %v196, %v383
        %392 = vst [vmem:[%s188] sm:$0xff] %v384
        %393 = vst [vmem:[%s188 + $0x8] sm:$0xff] %v385
        %394 = vst [vmem:[%s188 + $0x10] sm:$0xff] %v386
        %395 = vst [vmem:[%s188 + $0x18] sm:$0xff] %v387
        %396 = vst [vmem:[%s188 + $0x20] sm:$0xff] %v388
        %397 = vst [vmem:[%s188 + $0x28] sm:$0xff] %v389
        %398 = vst [vmem:[%s188 + $0x30] sm:$0xff] %v390
        %399 = vst [vmem:[%s188 + $0x38] sm:$0xff] %v391
        %s400 = sand.u32 %s96, 1
        %s401 = scalar_lea.sflag [#allocation4], %s400
        %s402 = sand.u32 %s96, 1
        %s403 = smul.addr %s402, 64
        %s404 = scalar_lea.vmem [#allocation5], %s403
        // Predicated region
        $region37: #{tpu_custom_call.1} parent=31 // pred_check
          %p405 = pneg %p106
        $region38: #{tpu_custom_call.1} parent=31 // pred_check_branch
          %407 = sbr.rel (%p405) target = $region40
        $region39: #{tpu_custom_call.1} parent=31 // pred_region
          %s409 = ssub.s32 1024, 1024
          %410 = vsyncadd %s401, %s409
          %s411 = smul.addr %s20, 8
          %s412 = smul.addr %s411, 128
          %s413 = scalar_lea.hbm %s3, %s412
          %s414 = sshll.u32 %s404, 4
          %s415 = int_to_ptr.vmem [resolvable:$true] %s414
          %420 = dma.vmem_to_hbm [thread:$0]  %s415, 1024, %s413, %s401, 256, 256, 16
        $region40: #{tpu_custom_call.1} parent=31 // pred_fallthru
          _
      $region32: #{tpu_custom_call.1} parent=5 // pred_fallthru
        _
      %p421 = scmp.le.s32.totalorder 2, %s15
      // Predicated region
      $region41: #{tpu_custom_call.1} parent=5 // pred_check
        %p422 = pneg %p421
      $region42: #{tpu_custom_call.1} parent=5 // pred_check_branch
        %424 = sbr.rel (%p422) target = $region44
      $region43: #{tpu_custom_call.1} parent=5 // pred_region
        %s425 = ssub.s32 %s15, 2
        // Predicated region
        $region45: #{tpu_custom_call.1} parent=43 // pred_check
          %p426 = pneg %p112
        $region46: #{tpu_custom_call.1} parent=43 // pred_check_branch
          %428 = sbr.rel (%p426) target = $region48
        $region47: #{tpu_custom_call.1} parent=43 // pred_region
          %s429 = sand.u32 %s97, 1
          %s430 = scalar_lea.sflag [#allocation4], %s429
          %s431 = sand.u32 %s97, 1
          %s432 = smul.addr %s431, 64
          %s433 = scalar_lea.vmem [#allocation5], %s432
          %434 = dma.done %s430, 1024
        $region48: #{tpu_custom_call.1} parent=43 // pred_fallthru
          _
      $region44: #{tpu_custom_call.1} parent=5 // pred_fallthru
        _
    $region6: #{tpu_custom_call.1} parent=1 // loop_footer
      %s19 = sadd.s32 1, %s15
    $region7: #{tpu_custom_call.1} parent=1 // loop_footer_branch
      %14 = sbr.rel target = $region3
    $region8: #{tpu_custom_call.1} parent=1 // loop_exit
      _
    %435 = vsyncpa [#allocation3], 1
    %s436 = scalar_lea.sflag [#allocation3], 1
    %437 = vsyncpa %s436, 1
    %438 = vsyncpa [#allocation4], 1
    %s439 = scalar_lea.sflag [#allocation4], 1
    %440 = vsyncpa %s439, 1

</llo_original>
